<compile_context>
chip_gen: v7x
topology: tpu7x:2x2x1
jax: 0.10.0
libtpu: 0.0.40
codegen_flags: <defaults>
</compile_context>

<pallas_src>
import functools
import math

import jax
import jax.numpy as jnp
import numpy as np
from jax.experimental import pallas as pl
from jax.experimental.pallas import tpu as pltpu

OUT_DIM = 7    # real MLP output width
OUT_PAD = 8    # sublane-padded output width written by the kernel (7 -> 8)


# ----------------------------------------------------------------------------
# Pallas kernel: tiny MLP in transposed (N-on-lanes) layout
#   feat_t (20, TN), w1t (64, 20), b1t (64, 1), w2t (8, 64), b2t (8, 1)
# ----------------------------------------------------------------------------
def mlp_kernel(feat_ref, w1t_ref, b1t_ref, w2t_ref, b2t_ref, o_ref):
    feat = feat_ref[...]                                              # (20, TN)
    h = jnp.dot(w1t_ref[...], feat,
                preferred_element_type=jnp.float32) + b1t_ref[...]   # (64, TN)
    h = jnp.where(h > 0, h, 0.01 * h)                                 # LeakyReLU
    o = jnp.dot(w2t_ref[...], h,
                preferred_element_type=jnp.float32) + b2t_ref[...]   # (8, TN)
    o_ref[...] = o.astype(o_ref.dtype)


def _round_up(a, m):
    return ((a + m - 1) // m) * m


def _plan_tiles(n, tile_n):
    """Lane axis is N: pad N up to a multiple of 128 and tile it.  No forced
    extra grid steps (on single-TC v5e/v6e a second step is pure overhead)."""
    tile_n = max(128, _round_up(tile_n, 128))
    n128 = _round_up(max(n, 1), 128)
    tile = min(tile_n, n128)
    steps = pl.cdiv(n128, tile)
    return tile, steps, tile * steps


def tinymlp(feat_t, w1, b1, w2, b2, *, tile_n=2048):
    """feat_t (20, N) -> (N, 7) via the Pallas MLP kernel (transposed layout)."""
    fdim, n = feat_t.shape
    hidden = w1.shape[1]
    tile, steps, n_pad = _plan_tiles(n, tile_n)
    if n_pad != n:
        feat_t = jnp.pad(feat_t, ((0, 0), (0, n_pad - n)))

    # Transposed / padded weights: pad 7 -> 8 on the SUBLANE axis (cheap),
    # keep N lane-dense.  Extra output rows are sliced off below.
    w1t = w1.T                                                     # (64, 20)
    b1t = b1.reshape(hidden, 1)                                    # (64, 1)
    w2t = jnp.pad(w2.T, ((0, OUT_PAD - OUT_DIM), (0, 0)))          # (8, 64)
    b2t = jnp.pad(b2.reshape(OUT_DIM, 1),
                  ((0, OUT_PAD - OUT_DIM), (0, 0)))                # (8, 1)

    cost = pl.CostEstimate(
        flops=2 * n_pad * (fdim * hidden + hidden * OUT_PAD),
        transcendentals=0,
        bytes_accessed=4 * (n_pad * fdim + n_pad * OUT_PAD
                            + fdim * hidden + hidden
                            + hidden * OUT_PAD + OUT_PAD),
    )

    # NOTE(perf review): the four weight inputs have constant index_maps;
    # pl.Buffered(1) would shave ~38 KB of VMEM but buffer_count=1 is not
    # accepted by every jax release, so the default pipelining is kept.
    out = pl.pallas_call(
        mlp_kernel,
        out_shape=jax.ShapeDtypeStruct((OUT_PAD, n_pad), jnp.float32),
        grid=(steps,),
        in_specs=[
            pl.BlockSpec((fdim, tile), lambda i: (0, i)),
            pl.BlockSpec((hidden, fdim), lambda i: (0, 0)),
            pl.BlockSpec((hidden, 1), lambda i: (0, 0)),
            pl.BlockSpec((OUT_PAD, hidden), lambda i: (0, 0)),
            pl.BlockSpec((OUT_PAD, 1), lambda i: (0, 0)),
        ],
        out_specs=pl.BlockSpec((OUT_PAD, tile), lambda i: (0, i)),
        compiler_params=pltpu.CompilerParams(
            dimension_semantics=("parallel",)),
        cost_estimate=cost,
    )(feat_t, w1t, b1t, w2t, b2t)
    return out[:OUT_DIM, :n].T                                     # (N, 7)


# ----------------------------------------------------------------------------
# XLA glue: positional encoding + trilinear grid_sample (fused gather + combine)
# ----------------------------------------------------------------------------
def positional_encoding(x, num_frequencies=3):
    pe = []
    for i in range(num_frequencies):
        f = (2.0 ** i) * math.pi
        pe.append(jnp.sin(f * x))
        pe.append(jnp.cos(f * x))
    return jnp.concatenate(pe, axis=-1)          # (N, 18)


def _unnormalize(c, size):
    # PyTorch grid_sample, align_corners=False
    t = ((c + 1.0) * size - 1.0) / 2.0
    t0 = jnp.floor(t)
    return t0.astype(jnp.int32), t - t0


def trilinear_sample_t(grid, coords):
    """grid (C, D, H, W); coords (N,3) in PyTorch (x->W, y->H, z->D) order.
    Single fused 8-corner gather + trilinear weighted sum -> (C, N) so the
    transposed feature matrix is produced for free.  Zero padding is folded
    into the weights (invalid corners get weight 0)."""
    C, D, H, W = grid.shape
    ix0, fx = _unnormalize(coords[:, 0], W)
    iy0, fy = _unnormalize(coords[:, 1], H)
    iz0, fz = _unnormalize(coords[:, 2], D)

    idxs, wgts = [], []
    for dz in (0, 1):
        for dy in (0, 1):
            for dx in (0, 1):
                ix, iy, iz = ix0 + dx, iy0 + dy, iz0 + dz
                valid = ((ix >= 0) & (ix < W) & (iy >= 0) & (iy < H)
                         & (iz >= 0) & (iz < D))
                ixc = jnp.clip(ix, 0, W - 1)
                iyc = jnp.clip(iy, 0, H - 1)
                izc = jnp.clip(iz, 0, D - 1)
                idxs.append((izc * H + iyc) * W + ixc)
                wx = fx if dx else (1.0 - fx)
                wy = fy if dy else (1.0 - fy)
                wz = fz if dz else (1.0 - fz)
                wgts.append(jnp.where(valid, wx * wy * wz, 0.0))

    idx = jnp.stack(idxs, axis=0)                         # (8, N) int32
    wgt = jnp.stack(wgts, axis=0)                         # (8, N) f32
    gflat = grid.reshape(C, D * H * W)
    vals = jnp.take(gflat, idx, axis=1, mode="clip")      # (C, 8, N) one gather
    return jnp.einsum('ckn,kn->cn', vals, wgt)            # (C, N)


def interpolate_t(grids, pe):
    feats = []
    for i, g in enumerate(grids):
        for j in range(2):
            coords = pe[:, i * 6 + 3 * j: i * 6 + 3 * j + 3]
            feats.append(trilinear_sample_t(g, coords))
    return jnp.concatenate(feats, axis=0)                 # (20, N)


def motion_grid_forward(x, grids, w1, b1, w2, b2, *, tile_n=2048):
    pe = positional_encoding(x)                            # (N, 18)
    feat_t = interpolate_t(grids, pe)                      # (20, N)
    return tinymlp(feat_t, w1, b1, w2, b2, tile_n=tile_n)  # (N, 7)


# ----------------------------------------------------------------------------
# Independent pure-JAX reference (per-corner accumulation, no fused gather)
# ----------------------------------------------------------------------------
def _reference_forward(x, grids, w1, b1, w2, b2):
    pe = positional_encoding(x)
    feats = []
    for i, g in enumerate(grids):
        C, D, H, W = g.shape
        gflat = g.reshape(C, D * H * W)
        for j in range(2):
            coords = pe[:, i * 6 + 3 * j: i * 6 + 3 * j + 3]
            ix0, fx = _unnormalize(coords[:, 0], W)
            iy0, fy = _unnormalize(coords[:, 1], H)
            iz0, fz = _unnormalize(coords[:, 2], D)
            acc = jnp.zeros((coords.shape[0], C), jnp.float32)
            for dz in (0, 1):
                for dy in (0, 1):
                    for dx in (0, 1):
                        ix, iy, iz = ix0 + dx, iy0 + dy, iz0 + dz
                        valid = ((ix >= 0) & (ix < W) & (iy >= 0) & (iy < H)
                                 & (iz >= 0) & (iz < D)).astype(jnp.float32)
                        idx = (jnp.clip(iz, 0, D - 1) * H
                               + jnp.clip(iy, 0, H - 1)) * W + jnp.clip(ix, 0, W - 1)
                        v = jnp.take(gflat, idx, axis=1).T            # (N, C)
                        wx = fx if dx else (1.0 - fx)
                        wy = fy if dy else (1.0 - fy)
                        wz = fz if dz else (1.0 - fz)
                        acc = acc + v * (wx * wy * wz * valid)[:, None]
            feats.append(acc)
    feat = jnp.concatenate(feats, axis=-1)
    h = feat @ w1 + b1
    h = jnp.where(h > 0, h, 0.01 * h)
    return h @ w2 + b2


# ----------------------------------------------------------------------------
# main
# ----------------------------------------------------------------------------
if __name__ == "__main__":
    key = jax.random.PRNGKey(0)
    k_x, k_g0, k_g1, k_g2, k_w1, k_b1, k_w2, k_b2 = jax.random.split(key, 8)

    N = 256           # number of query points
    TILE_N = 2048     # max rows per Pallas grid step (lane axis)

    # query coordinates
    x = jax.random.uniform(k_x, (N, 3), jnp.float32, minval=-1.0, maxval=1.0)

    # feature grids (torch.randn(1, C, S, S, S) with the leading batch squeezed)
    grids = (
        jax.random.normal(k_g0, (4, 32, 32, 32), jnp.float32),
        jax.random.normal(k_g1, (4, 64, 64, 64), jnp.float32),
        jax.random.normal(k_g2, (2, 128, 128, 128), jnp.float32),
    )

    # tinymlp parameters: Linear(20,64) -> LeakyReLU -> Linear(64,7)
    # (weights stored transposed: (in_features, out_features))
    lim1 = 1.0 / math.sqrt(20.0)
    lim2 = 1.0 / math.sqrt(64.0)
    w1 = jax.random.uniform(k_w1, (20, 64), jnp.float32, -lim1, lim1)
    b1 = jax.random.uniform(k_b1, (1, 64), jnp.float32, -lim1, lim1)
    w2 = jax.random.uniform(k_w2, (64, 7), jnp.float32, -lim2, lim2)
    b2 = jax.random.uniform(k_b2, (1, 7), jnp.float32, -lim2, lim2)

    fwd = jax.jit(functools.partial(motion_grid_forward, tile_n=TILE_N))
    out = jax.block_until_ready(fwd(x, grids, w1, b1, w2, b2))

    out_ref = _reference_forward(x, grids, w1, b1, w2, b2)
    np.testing.assert_allclose(np.asarray(out), np.asarray(out_ref),
                               rtol=1e-4, atol=1e-4)

    assert out.shape == (N, 7) and out.dtype == jnp.float32
    print("KERNEL_OK")
</pallas_src>

<mosaic_0001>
module attributes {stable_mosaic.version = 11 : i64} {
  func.func private @main(%arg0: i32) attributes {dimension_semantics = [#tpu.dimension_semantics<core_parallel>], iteration_bounds = array<i64: 2>, tpu.core_type = #tpu.core_type<sc_scalar_subcore>, window_params = []} {
    return
  }
}

module attributes {stable_mosaic.version = 11 : i64} {
  func.func private @main(%arg0: i32) attributes {dimension_semantics = [#tpu.dimension_semantics<core_parallel>], iteration_bounds = array<i64: 2>, tpu.core_type = #tpu.core_type<sc_scalar_subcore>, window_params = []} {
    return
  }
}

module attributes {stable_mosaic.version = 11 : i64} {
  func.func @mlp_kernel(%arg0: i32, %arg1: memref<20x256xf32, #tpu.memory_space<vmem>>, %arg2: memref<64x20xf32, #tpu.memory_space<vmem>>, %arg3: memref<64x1xf32, #tpu.memory_space<vmem>>, %arg4: memref<8x64xf32, #tpu.memory_space<vmem>>, %arg5: memref<8x1xf32, #tpu.memory_space<vmem>>, %arg6: memref<8x256xf32, #tpu.memory_space<vmem>>) attributes {dimension_semantics = [#tpu.dimension_semantics<parallel>], iteration_bounds = array<i64: 1>, scalar_prefetch = 0 : i64, scratch_operands = 0 : i64, tpu.core_type = #tpu.core_type<tc>, window_params = [{transform_indices = @transform_0, window_bounds = array<i64: 20, 256>}, {pipeline_mode = #tpu.pipeline_mode<synchronous>, transform_indices = @transform_1, window_bounds = array<i64: 64, 20>}, {pipeline_mode = #tpu.pipeline_mode<synchronous>, transform_indices = @transform_2, window_bounds = array<i64: 64, 1>}, {pipeline_mode = #tpu.pipeline_mode<synchronous>, transform_indices = @transform_3, window_bounds = array<i64: 8, 64>}, {pipeline_mode = #tpu.pipeline_mode<synchronous>, transform_indices = @transform_4, window_bounds = array<i64: 8, 1>}, {transform_indices = @transform_5, window_bounds = array<i64: 8, 256>}]} {
    %c0 = arith.constant 0 : index
    %c0_0 = arith.constant 0 : index
    %0 = vector.load %arg1[%c0, %c0_0] : memref<20x256xf32, #tpu.memory_space<vmem>>, vector<20x256xf32>
    %c0_1 = arith.constant 0 : index
    %c0_2 = arith.constant 0 : index
    %1 = vector.load %arg2[%c0_1, %c0_2] : memref<64x20xf32, #tpu.memory_space<vmem>>, vector<64x20xf32>
    %cst = arith.constant dense<0.000000e+00> : vector<64x256xf32>
    %2 = tpu.matmul %1, %0, %cst {dimension_numbers = #tpu.dot_dimension_numbers<[1], [0], [0], [1], [0, 0, 1, 1], [], []>} : vector<64x20xf32>, vector<20x256xf32>, vector<64x256xf32> -> vector<64x256xf32>
    %c0_3 = arith.constant 0 : index
    %c0_4 = arith.constant 0 : index
    %3 = vector.load %arg3[%c0_3, %c0_4] : memref<64x1xf32, #tpu.memory_space<vmem>>, vector<64x1xf32>
    %4 = vector.broadcast %3 : vector<64x1xf32> to vector<64x256xf32>
    %5 = arith.addf %2, %4 : vector<64x256xf32>
    %cst_5 = arith.constant 0.000000e+00 : f32
    %6 = vector.broadcast %cst_5 : f32 to vector<64x256xf32>
    %7 = arith.cmpf ogt, %5, %6 : vector<64x256xf32>
    %cst_6 = arith.constant 0.00999999977 : f32
    %8 = vector.broadcast %cst_6 : f32 to vector<64x256xf32>
    %9 = arith.mulf %8, %5 : vector<64x256xf32>
    %10 = arith.select %7, %5, %9 : vector<64x256xi1>, vector<64x256xf32>
    %c0_7 = arith.constant 0 : index
    %c0_8 = arith.constant 0 : index
    %11 = vector.load %arg4[%c0_7, %c0_8] : memref<8x64xf32, #tpu.memory_space<vmem>>, vector<8x64xf32>
    %cst_9 = arith.constant dense<0.000000e+00> : vector<8x256xf32>
    %12 = tpu.matmul %11, %10, %cst_9 {dimension_numbers = #tpu.dot_dimension_numbers<[1], [0], [0], [1], [0, 0, 1, 1], [], []>} : vector<8x64xf32>, vector<64x256xf32>, vector<8x256xf32> -> vector<8x256xf32>
    %c0_10 = arith.constant 0 : index
    %c0_11 = arith.constant 0 : index
    %13 = vector.load %arg5[%c0_10, %c0_11] : memref<8x1xf32, #tpu.memory_space<vmem>>, vector<8x1xf32>
    %14 = vector.broadcast %13 : vector<8x1xf32> to vector<8x256xf32>
    %15 = arith.addf %12, %14 : vector<8x256xf32>
    %c0_12 = arith.constant 0 : index
    %c0_13 = arith.constant 0 : index
    %16 = vector.load %arg6[%c0_12, %c0_13] : memref<8x256xf32, #tpu.memory_space<vmem>>, vector<8x256xf32>
    tpu.vector_store %arg6[%c0_12, %c0_13], %15 {strides = array<i32>} : memref<8x256xf32, #tpu.memory_space<vmem>>, vector<8x256xf32>,
    return
  }
  func.func @transform_0(%arg0: i32) -> (i32, i32) {
    %c0_i32 = arith.constant 0 : i32
    %c0_i32_0 = arith.constant 0 : i32
    return %c0_i32, %arg0 : i32, i32
  }
  func.func @transform_1(%arg0: i32) -> (i32, i32) {
    %c0_i32 = arith.constant 0 : i32
    %c0_i32_0 = arith.constant 0 : i32
    %c0_i32_1 = arith.constant 0 : i32
    return %c0_i32, %c0_i32_0 : i32, i32
  }
  func.func @transform_2(%arg0: i32) -> (i32, i32) {
    %c0_i32 = arith.constant 0 : i32
    %c0_i32_0 = arith.constant 0 : i32
    %c0_i32_1 = arith.constant 0 : i32
    return %c0_i32, %c0_i32_0 : i32, i32
  }
  func.func @transform_3(%arg0: i32) -> (i32, i32) {
    %c0_i32 = arith.constant 0 : i32
    %c0_i32_0 = arith.constant 0 : i32
    %c0_i32_1 = arith.constant 0 : i32
    return %c0_i32, %c0_i32_0 : i32, i32
  }
  func.func @transform_4(%arg0: i32) -> (i32, i32) {
    %c0_i32 = arith.constant 0 : i32
    %c0_i32_0 = arith.constant 0 : i32
    %c0_i32_1 = arith.constant 0 : i32
    return %c0_i32, %c0_i32_0 : i32, i32
  }
  func.func @transform_5(%arg0: i32) -> (i32, i32) {
    %c0_i32 = arith.constant 0 : i32
    %c0_i32_0 = arith.constant 0 : i32
    return %c0_i32, %arg0 : i32, i32
  }
}

</mosaic_0001>

<llo_original>
// kernel: motion_grid_forward.1
$region0: #{motion_grid_forward.1}
  #allocation0 [shape = 'u32[]', space=smem, size = 0x4, offset = 0x4, fixed_abs, tag = 'smem constant byte address 0x4 - core index']
  #allocation1 [shape = 'u32[144,128]{1,0:T(1,128)}', space=vmem, size = 0x12000, scoped, tag = 'internal scratch']
  %s0 = inlined_call_operand.vmem [shape: f32[20,256], index: 0, kind: input, shape index: {}]
  %s1 = inlined_call_operand.vmem [shape: f32[64,20], index: 1, kind: input, shape index: {}]
  %s2 = inlined_call_operand.vmem [shape: f32[64,1], index: 2, kind: input, shape index: {}]
  %s3 = inlined_call_operand.vmem [shape: f32[8,64], index: 3, kind: input, shape index: {}]
  %s4 = inlined_call_operand.vmem [shape: f32[8,1], index: 4, kind: input, shape index: {}]
  %s5 = inlined_call_operand.vmem [shape: f32[8,256], index: 5, kind: output, shape index: {}]
  %s6 = sld [smem:[#allocation0]]
  $region30: #{motion_grid_forward.1} parent=0
    _
  %s8 = ssub.s32 1, %s6
  %s9 = scalar_select 0, %s8, %s6
  // Predicated region
  $region2: #{motion_grid_forward.1} parent=0 // pred_check
    _
  $region3: #{motion_grid_forward.1} parent=0 // pred_check_branch
    %11 = sbr.rel (0) target = $region5
  $region4: #{motion_grid_forward.1} parent=0 // pred_region
    _
  $region5: #{motion_grid_forward.1} parent=0 // pred_fallthru
    _
  // Predicated region
  $region6: #{motion_grid_forward.1} parent=0 // pred_check
    _
  $region7: #{motion_grid_forward.1} parent=0 // pred_check_branch
    %13 = sbr.rel (0) target = $region9
  $region8: #{motion_grid_forward.1} parent=0 // pred_region
    _
  $region9: #{motion_grid_forward.1} parent=0 // pred_fallthru
    _
  // Predicated region
  $region10: #{motion_grid_forward.1} parent=0 // pred_check
    _
  $region11: #{motion_grid_forward.1} parent=0 // pred_check_branch
    %15 = sbr.rel (0) target = $region13
  $region12: #{motion_grid_forward.1} parent=0 // pred_region
    _
  $region13: #{motion_grid_forward.1} parent=0 // pred_fallthru
    _
  // Predicated region
  $region14: #{motion_grid_forward.1} parent=0 // pred_check
    _
  $region15: #{motion_grid_forward.1} parent=0 // pred_check_branch
    %17 = sbr.rel (0) target = $region17
  $region16: #{motion_grid_forward.1} parent=0 // pred_region
    _
  $region17: #{motion_grid_forward.1} parent=0 // pred_fallthru
    _
  // Predicated region
  $region18: #{motion_grid_forward.1} parent=0 // pred_check
    _
  $region19: #{motion_grid_forward.1} parent=0 // pred_check_branch
    %19 = sbr.rel (0) target = $region21
  $region20: #{motion_grid_forward.1} parent=0 // pred_region
    _
  $region21: #{motion_grid_forward.1} parent=0 // pred_fallthru
    _
  %v20 = vld [vmem:[%s0] sm:$0xff]
  %v21 = vld [vmem:[%s0 + $0x8] sm:$0xff]
  %v22 = vld [vmem:[%s0 + $0x10] sm:$0xff]
  %v23 = vld [vmem:[%s0 + $0x18] sm:$0xff]
  %v24 = vld [vmem:[%s0 + $0x20] sm:$0xf]
  %v25 = vld [vmem:[%s0 + $0x28] sm:$0xf]
  %v26 = vld [vmem:[%s1] sm:$0xff]
  %v27 = vld [vmem:[%s1 + $0x8] sm:$0xff]
  %v28 = vld [vmem:[%s1 + $0x10] sm:$0xff]
  %v29 = vld [vmem:[%s1 + $0x18] sm:$0xff]
  %v30 = vld [vmem:[%s1 + $0x20] sm:$0xff]
  %v31 = vld [vmem:[%s1 + $0x28] sm:$0xff]
  %v32 = vld [vmem:[%s1 + $0x30] sm:$0xff]
  %v33 = vld [vmem:[%s1 + $0x38] sm:$0xff]
  %v34 = vld [vmem:[%s2] sm:$0xff]
  %v35 = vld [vmem:[%s2 + $0x8] sm:$0xff]
  %v36 = vld [vmem:[%s2 + $0x10] sm:$0xff]
  %v37 = vld [vmem:[%s2 + $0x18] sm:$0xff]
  %v38 = vld [vmem:[%s2 + $0x20] sm:$0xff]
  %v39 = vld [vmem:[%s2 + $0x28] sm:$0xff]
  %v40 = vld [vmem:[%s2 + $0x30] sm:$0xff]
  %v41 = vld [vmem:[%s2 + $0x38] sm:$0xff]
  %43 = vset.pattern.permute.xlu0 0
  %44 = vperm.xlu0 %43, %v34
  %v45 = vpop.permute.xlu0 %44
  %48 = vset.pattern.permute.xlu0 0
  %49 = vperm.xlu0 %48, %v35
  %v50 = vpop.permute.xlu0 %49
  %53 = vset.pattern.permute.xlu0 0
  %54 = vperm.xlu0 %53, %v36
  %v55 = vpop.permute.xlu0 %54
  %58 = vset.pattern.permute.xlu0 0
  %59 = vperm.xlu0 %58, %v37
  %v60 = vpop.permute.xlu0 %59
  %63 = vset.pattern.permute.xlu0 0
  %64 = vperm.xlu0 %63, %v38
  %v65 = vpop.permute.xlu0 %64
  %68 = vset.pattern.permute.xlu0 0
  %69 = vperm.xlu0 %68, %v39
  %v70 = vpop.permute.xlu0 %69
  %73 = vset.pattern.permute.xlu0 0
  %74 = vperm.xlu0 %73, %v40
  %v75 = vpop.permute.xlu0 %74
  %78 = vset.pattern.permute.xlu0 0
  %79 = vperm.xlu0 %78, %v41
  %v80 = vpop.permute.xlu0 %79
  %vm82 = vcmask 162816
  %v84 = vsel %vm82, %v26, 0
  %v87 = vsel %vm82, %v27, 0
  %v90 = vsel %vm82, %v28, 0
  %v93 = vsel %vm82, %v29, 0
  %v96 = vsel %vm82, %v30, 0
  %v99 = vsel %vm82, %v31, 0
  %v102 = vsel %vm82, %v32, 0
  %v105 = vsel %vm82, %v33, 0
  %vm107 = vcmask 1043456
  %v109 = vsel %vm107, %v24, 0
  %v112 = vsel %vm107, %v25, 0
  %114 = vmatprep.subr.mxu0 %v21
  %115 = vmatpush1.msra.mxu0 %v20
  %116 = vmatprep.subr.mxu0 %v23
  %117 = vmatpush1.msra.mxu0 %v22
  %118 = vmatprep.subr.mxu0 %v112
  %119 = vmatpush1.msra.mxu0 %v109
  %120 = vmatprep.subr.mxu0 0.0
  %121 = vmatpush1.msra.mxu0 0.0
  %122 = vmatprep.subr.mxu0 0.0
  %123 = vmatpush1.msra.mxu0 0.0
  %124 = vmatprep.subr.mxu0 0.0
  %125 = vmatpush1.msra.mxu0 0.0
  %126 = vmatprep.subr.mxu0 0.0
  %127 = vmatpush1.msra.mxu0 0.0
  %128 = vmatprep.subr.mxu0 0.0
  %129 = vmatpush1.msra.mxu0 0.0
  %130 = vmatprep.subr.mxu0 0.0
  %131 = vmatpush1.msra.mxu0 0.0
  %132 = vmatprep.subr.mxu0 0.0
  %133 = vmatpush1.msra.mxu0 0.0
  %134 = vmatprep.subr.mxu0 0.0
  %135 = vmatpush1.msra.mxu0 0.0
  %136 = vmatprep.subr.mxu0 0.0
  %137 = vmatpush1.msra.mxu0 0.0
  %138 = vmatprep.subr.mxu0 0.0
  %139 = vmatpush1.msra.mxu0 0.0
  %140 = vmatprep.subr.mxu0 0.0
  %141 = vmatpush1.msra.mxu0 0.0
  %142 = vmatprep.subr.mxu0 0.0
  %143 = vmatpush1.msra.mxu0 0.0
  %144 = vmatprep.subr.mxu0 0.0
  %145 = vmatpush1.msra.mxu0 0.0
  %146 = vmatprep.subr.mxu0 0.0
  %147 = vmatpush1.msra.mxu0 0.0
  %148 = vmatprep.subr.mxu0 0.0
  %149 = vmatpush1.msra.mxu0 0.0
  %150 = vmatprep.subr.mxu0 0.0
  %151 = vmatpush1.msra.mxu0 0.0
  %152 = vmatprep.subr.mxu0 0.0
  %153 = vmatpush1.msra.mxu0 0.0
  %154 = vmatprep.subr.mxu0 0.0
  %155 = vmatpush1.msra.mxu0 0.0
  %156 = vmatprep.subr.mxu0 0.0
  %157 = vmatpush1.msra.mxu0 0.0
  %158 = vmatprep.subr.mxu0 0.0
  %159 = vmatpush1.msra.mxu0 0.0
  %160 = vmatprep.subr.mxu0 0.0
  %161 = vmatpush1.msra.mxu0 0.0
  %162 = vmatprep.subr.mxu0 0.0
  %163 = vmatpush1.msra.mxu0 0.0
  %164 = vmatprep.subr.mxu0 0.0
  %165 = vmatpush1.msra.mxu0 0.0
  %166 = vmatprep.subr.mxu0 0.0
  %167 = vmatpush1.msra.mxu0 0.0
  %168 = vmatprep.subr.mxu0 0.0
  %169 = vmatpush1.msra.mxu0 0.0
  %170 = vmatprep.subr.mxu0 0.0
  %171 = vmatpush1.msra.mxu0 0.0
  %172 = vmatprep.subr.mxu0 0.0
  %173 = vmatpush1.msra.mxu0 0.0
  %174 = vmatprep.subr.mxu0 0.0
  %175 = vmatpush1.msra.mxu0 0.0
  %176 = vmatprep.subr.mxu0 0.0
  %177 = vmatpush1.msra.mxu0 0.0
  %178 = vmatprep.mubr.f32.mxu0 0.0
  %179 = vmatmul.mubr.f32.gmra.mrb[0].mxu0 %v84
  %v180 = vpop.f32.mrb[0].mxu0
  %v181 = vadd.f32 %v45, %v180
  %v182 = vpop.f32.mrb[0].mxu0
  %v183 = vadd.f32 %v45, %v182
  %184 = vmatprep.mubr.f32.mxu0 0.0
  %185 = vmatmul.mubr.f32.gmra.mrb[0].mxu0 %v87
  %v186 = vpop.f32.mrb[0].mxu0
  %v187 = vadd.f32 %v50, %v186
  %v188 = vpop.f32.mrb[0].mxu0
  %v189 = vadd.f32 %v50, %v188
  %190 = vmatprep.mubr.f32.mxu0 0.0
  %191 = vmatmul.mubr.f32.gmra.mrb[0].mxu0 %v90
  %v192 = vpop.f32.mrb[0].mxu0
  %v193 = vadd.f32 %v55, %v192
  %v194 = vpop.f32.mrb[0].mxu0
  %v195 = vadd.f32 %v55, %v194
  %196 = vmatprep.mubr.f32.mxu0 0.0
  %197 = vmatmul.mubr.f32.gmra.mrb[0].mxu0 %v93
  %v198 = vpop.f32.mrb[0].mxu0
  %v199 = vadd.f32 %v60, %v198
  %v200 = vpop.f32.mrb[0].mxu0
  %v201 = vadd.f32 %v60, %v200
  %202 = vmatprep.mubr.f32.mxu0 0.0
  %203 = vmatmul.mubr.f32.gmra.mrb[0].mxu0 %v96
  %v204 = vpop.f32.mrb[0].mxu0
  %v205 = vadd.f32 %v65, %v204
  %v206 = vpop.f32.mrb[0].mxu0
  %v207 = vadd.f32 %v65, %v206
  %208 = vmatprep.mubr.f32.mxu0 0.0
  %209 = vmatmul.mubr.f32.gmra.mrb[0].mxu0 %v99
  %v210 = vpop.f32.mrb[0].mxu0
  %v211 = vadd.f32 %v70, %v210
  %v212 = vpop.f32.mrb[0].mxu0
  %v213 = vadd.f32 %v70, %v212
  %214 = vmatprep.mubr.f32.mxu0 0.0
  %215 = vmatmul.mubr.f32.gmra.mrb[0].mxu0 %v102
  %v216 = vpop.f32.mrb[0].mxu0
  %v217 = vadd.f32 %v75, %v216
  %v218 = vpop.f32.mrb[0].mxu0
  %v219 = vadd.f32 %v75, %v218
  %220 = vmatprep.mubr.f32.mxu0 0.0
  %221 = vmatmul.mubr.f32.gmra.mrb[0].mxu0 %v105
  %v222 = vpop.f32.mrb[0].mxu0
  %v223 = vadd.f32 %v80, %v222
  %v224 = vpop.f32.mrb[0].mxu0
  %v225 = vadd.f32 %v80, %v224
  %226 = vdwg.mxu0
  %vm227 = vcmp.gt.f32.partialorder %v181, 0.0
  %vm228 = vcmp.gt.f32.partialorder %v183, 0.0
  %vm229 = vcmp.gt.f32.partialorder %v187, 0.0
  %vm230 = vcmp.gt.f32.partialorder %v189, 0.0
  %vm231 = vcmp.gt.f32.partialorder %v193, 0.0
  %vm232 = vcmp.gt.f32.partialorder %v195, 0.0
  %vm233 = vcmp.gt.f32.partialorder %v199, 0.0
  %vm234 = vcmp.gt.f32.partialorder %v201, 0.0
  %vm235 = vcmp.gt.f32.partialorder %v205, 0.0
  %vm236 = vcmp.gt.f32.partialorder %v207, 0.0
  %vm237 = vcmp.gt.f32.partialorder %v211, 0.0
  %vm238 = vcmp.gt.f32.partialorder %v213, 0.0
  %vm239 = vcmp.gt.f32.partialorder %v217, 0.0
  %vm240 = vcmp.gt.f32.partialorder %v219, 0.0
  %vm241 = vcmp.gt.f32.partialorder %v223, 0.0
  %vm242 = vcmp.gt.f32.partialorder %v225, 0.0
  %v243 = vmul.f32 %v181, 0.01
  %v244 = vmul.f32 %v183, 0.01
  %v245 = vmul.f32 %v187, 0.01
  %v246 = vmul.f32 %v189, 0.01
  %v247 = vmul.f32 %v193, 0.01
  %v248 = vmul.f32 %v195, 0.01
  %v249 = vmul.f32 %v199, 0.01
  %v250 = vmul.f32 %v201, 0.01
  %v251 = vmul.f32 %v205, 0.01
  %v252 = vmul.f32 %v207, 0.01
  %v253 = vmul.f32 %v211, 0.01
  %v254 = vmul.f32 %v213, 0.01
  %v255 = vmul.f32 %v217, 0.01
  %v256 = vmul.f32 %v219, 0.01
  %v257 = vmul.f32 %v223, 0.01
  %v258 = vmul.f32 %v225, 0.01
  %v259 = vsel %vm227, %v181, %v243
  %v260 = vsel %vm228, %v183, %v244
  %v261 = vsel %vm229, %v187, %v245
  %v262 = vsel %vm230, %v189, %v246
  %v263 = vsel %vm231, %v193, %v247
  %v264 = vsel %vm232, %v195, %v248
  %v265 = vsel %vm233, %v199, %v249
  %v266 = vsel %vm234, %v201, %v250
  %v267 = vsel %vm235, %v205, %v251
  %v268 = vsel %vm236, %v207, %v252
  %v269 = vsel %vm237, %v211, %v253
  %v270 = vsel %vm238, %v213, %v254
  %v271 = vsel %vm239, %v217, %v255
  %v272 = vsel %vm240, %v219, %v256
  %v273 = vsel %vm241, %v223, %v257
  %v274 = vsel %vm242, %v225, %v258
  %v275 = vld [vmem:[%s3] sm:$0xff]
  %v276 = vld [vmem:[%s4] sm:$0xff]
  %278 = vset.pattern.permute.xlu0 0
  %279 = vperm.xlu0 %278, %v276
  %v280 = vpop.permute.xlu0 %279
  %vm282 = vcmask 523264
  %v284 = vsel %vm282, %v275, 0
  %286 = vmatprep.subr.mxu0 %v260
  %287 = vmatpush1.msra.mxu0 %v259
  %288 = vmatprep.subr.mxu0 %v262
  %289 = vmatpush1.msra.mxu0 %v261
  %290 = vmatprep.subr.mxu0 %v264
  %291 = vmatpush1.msra.mxu0 %v263
  %292 = vmatprep.subr.mxu0 %v266
  %293 = vmatpush1.msra.mxu0 %v265
  %294 = vmatprep.subr.mxu0 %v268
  %295 = vmatpush1.msra.mxu0 %v267
  %296 = vmatprep.subr.mxu0 %v270
  %297 = vmatpush1.msra.mxu0 %v269
  %298 = vmatprep.subr.mxu0 %v272
  %299 = vmatpush1.msra.mxu0 %v271
  %300 = vmatprep.subr.mxu0 %v274
  %301 = vmatpush1.msra.mxu0 %v273
  %302 = vmatprep.subr.mxu0 0.0
  %303 = vmatpush1.msra.mxu0 0.0
  %304 = vmatprep.subr.mxu0 0.0
  %305 = vmatpush1.msra.mxu0 0.0
  %306 = vmatprep.subr.mxu0 0.0
  %307 = vmatpush1.msra.mxu0 0.0
  %308 = vmatprep.subr.mxu0 0.0
  %309 = vmatpush1.msra.mxu0 0.0
  %310 = vmatprep.subr.mxu0 0.0
  %311 = vmatpush1.msra.mxu0 0.0
  %312 = vmatprep.subr.mxu0 0.0
  %313 = vmatpush1.msra.mxu0 0.0
  %314 = vmatprep.subr.mxu0 0.0
  %315 = vmatpush1.msra.mxu0 0.0
  %316 = vmatprep.subr.mxu0 0.0
  %317 = vmatpush1.msra.mxu0 0.0
  %318 = vmatprep.subr.mxu0 0.0
  %319 = vmatpush1.msra.mxu0 0.0
  %320 = vmatprep.subr.mxu0 0.0
  %321 = vmatpush1.msra.mxu0 0.0
  %322 = vmatprep.subr.mxu0 0.0
  %323 = vmatpush1.msra.mxu0 0.0
  %324 = vmatprep.subr.mxu0 0.0
  %325 = vmatpush1.msra.mxu0 0.0
  %326 = vmatprep.subr.mxu0 0.0
  %327 = vmatpush1.msra.mxu0 0.0
  %328 = vmatprep.subr.mxu0 0.0
  %329 = vmatpush1.msra.mxu0 0.0
  %330 = vmatprep.subr.mxu0 0.0
  %331 = vmatpush1.msra.mxu0 0.0
  %332 = vmatprep.subr.mxu0 0.0
  %333 = vmatpush1.msra.mxu0 0.0
  %334 = vmatprep.subr.mxu0 0.0
  %335 = vmatpush1.msra.mxu0 0.0
  %336 = vmatprep.subr.mxu0 0.0
  %337 = vmatpush1.msra.mxu0 0.0
  %338 = vmatprep.subr.mxu0 0.0
  %339 = vmatpush1.msra.mxu0 0.0
  %340 = vmatprep.subr.mxu0 0.0
  %341 = vmatpush1.msra.mxu0 0.0
  %342 = vmatprep.subr.mxu0 0.0
  %343 = vmatpush1.msra.mxu0 0.0
  %344 = vmatprep.subr.mxu0 0.0
  %345 = vmatpush1.msra.mxu0 0.0
  %346 = vmatprep.subr.mxu0 0.0
  %347 = vmatpush1.msra.mxu0 0.0
  %348 = vmatprep.subr.mxu0 0.0
  %349 = vmatpush1.msra.mxu0 0.0
  %350 = vmatprep.mubr.f32.mxu0 0.0
  %351 = vmatmul.mubr.f32.gmra.mrb[0].mxu0 %v284
  %v352 = vpop.f32.mrb[0].mxu0
  %v353 = vadd.f32 %v280, %v352
  %v354 = vpop.f32.mrb[0].mxu0
  %v355 = vadd.f32 %v280, %v354
  %356 = vdwg.mxu0
  %357 = vst [vmem:[%s5] sm:$0xff] %v353
  %358 = vst [vmem:[%s5 + $0x8] sm:$0xff] %v355
  // Predicated region
  $region22: #{motion_grid_forward.1} parent=0 // pred_check
    _
  $region23: #{motion_grid_forward.1} parent=0 // pred_check_branch
    %360 = sbr.rel (0) target = $region25
  $region24: #{motion_grid_forward.1} parent=0 // pred_region
    _
  $region25: #{motion_grid_forward.1} parent=0 // pred_fallthru
    _
  // Predicated region
  $region26: #{motion_grid_forward.1} parent=0 // pred_check
    _
  $region27: #{motion_grid_forward.1} parent=0 // pred_check_branch
    %362 = sbr.rel (0) target = $region29
  $region28: #{motion_grid_forward.1} parent=0 // pred_region
    _
  $region29: #{motion_grid_forward.1} parent=0 // pred_fallthru
    _

</llo_original>
